<compile_context>
chip_gen: v5e
topology: v5e:2x2
jax: 0.10.0
libtpu: 0.0.40
codegen_flags: <defaults>
</compile_context>

<pallas_src>
import functools

import jax
import jax.numpy as jnp
from jax.experimental import pallas as pl
from jax.experimental.pallas import tpu as pltpu

HID_DIM = 512   # hid_dim
PF_DIM = 256    # pf_dim   (fc_1: 512->256, fc_2: 256->512)
TILE_M = 256    # rows of x per grid step when M is large


# --------------------------- fused FFN kernel --------------------------------

def _ffn_kernel(x_ref, w1_ref, b1_ref, w2_ref, b2_ref, o_ref):
    """o = relu( relu(x @ w1 + b1) @ w2 + b2 )   (one M-tile per grid step)."""
    x = x_ref[...]                                        # (tm, D) f32
    # fc_1 + ReLU  (bf16 MXU operands, f32 accumulate, f32 elementwise)
    h = jnp.dot(x.astype(jnp.bfloat16), w1_ref[...],
                preferred_element_type=jnp.float32) + b1_ref[...]
    h = jnp.maximum(h, 0.0)
    # TODO(synk): nn.Dropout is identity here (eval mode); training-mode
    #             dropout would go here via pltpu.prng_* + stochastic mask.
    # fc_2 + ReLU
    y = jnp.dot(h.astype(jnp.bfloat16), w2_ref[...],
                preferred_element_type=jnp.float32) + b2_ref[...]
    o_ref[...] = jnp.maximum(y, 0.0)


def positionwise_feedforward(x, fc1_w, fc1_b, fc2_w, fc2_b, *, tile_m=TILE_M):
    """x: (..., hid_dim) f32.  fc1_w: (hid_dim, pf_dim), fc2_w: (pf_dim, hid_dim).

    hid_dim and pf_dim must be multiples of 128 (lane-dense tiles).
    """
    orig_shape = x.shape
    D = orig_shape[-1]
    PF = fc1_w.shape[1]

    x2d = x.reshape(-1, D)
    M = x2d.shape[0]

    # Pick the M tile: single full block for tiny inputs, 256-row tiles (padded)
    # otherwise so the grid can be pipelined / sharded across TensorCores.
    if M <= tile_m:
        tm, m_pad = M, M
    else:
        tm = tile_m
        m_pad = pl.cdiv(M, tm) * tm
    if m_pad != M:
        x2d = jnp.pad(x2d, ((0, m_pad - M), (0, 0)))

    grid = (m_pad // tm,)

    # Advisory cost hint for XLA's scheduler around the fused custom call.
    flops = 2 * m_pad * D * PF + 2 * m_pad * PF * D
    bytes_accessed = (4 * m_pad * D          # x load (f32)
                      + 2 * (D * PF + PF * D)  # bf16 weights
                      + 4 * (PF + D)           # f32 biases
                      + 4 * m_pad * D)         # output store (f32)
    cost = pl.CostEstimate(flops=flops, transcendentals=0,
                           bytes_accessed=bytes_accessed)

    out = pl.pallas_call(
        _ffn_kernel,
        out_shape=jax.ShapeDtypeStruct((m_pad, D), jnp.float32),
        grid_spec=pltpu.PrefetchScalarGridSpec(
            num_scalar_prefetch=0,
            grid=grid,
            in_specs=[
                pl.BlockSpec((tm, D), lambda i: (i, 0)),   # x tile (streams)
                pl.BlockSpec((D, PF), lambda i: (0, 0)),   # w1 (resident)
                pl.BlockSpec((1, PF), lambda i: (0, 0)),   # b1 (resident)
                pl.BlockSpec((PF, D), lambda i: (0, 0)),   # w2 (resident)
                pl.BlockSpec((1, D), lambda i: (0, 0)),    # b2 (resident)
            ],
            out_specs=pl.BlockSpec((tm, D), lambda i: (i, 0)),
        ),
        compiler_params=pltpu.CompilerParams(
            dimension_semantics=("parallel",)),
        cost_estimate=cost,
    )(
        x2d,
        fc1_w.astype(jnp.bfloat16),
        fc1_b.reshape(1, PF).astype(jnp.float32),
        fc2_w.astype(jnp.bfloat16),
        fc2_b.reshape(1, D).astype(jnp.float32),
    )

    if m_pad != M:
        out = out[:M]
    return out.reshape(orig_shape)


# --------------------------- pure-JAX reference ------------------------------

def _ffn_reference(x, fc1_w, fc1_b, fc2_w, fc2_b):
    """Same math (incl. bf16 MXU operands) without Pallas, for validation."""
    D = x.shape[-1]
    x2d = x.reshape(-1, D)
    h = jnp.dot(x2d.astype(jnp.bfloat16), fc1_w.astype(jnp.bfloat16),
                preferred_element_type=jnp.float32) + fc1_b
    h = jnp.maximum(h, 0.0)
    y = jnp.dot(h.astype(jnp.bfloat16), fc2_w.astype(jnp.bfloat16),
                preferred_element_type=jnp.float32) + fc2_b
    y = jnp.maximum(y, 0.0)
    return y.reshape(x.shape)


# --------------------------- main --------------------------------------------

if __name__ == "__main__":
    B, L = 2, 8
    D, PF = HID_DIM, PF_DIM

    key = jax.random.PRNGKey(0)
    kx, k1, k2, k3, k4 = jax.random.split(key, 5)
    x = jax.random.normal(kx, (B, L, D), jnp.float32)
    fc1_w = 0.02 * jax.random.normal(k1, (D, PF), jnp.float32)
    fc1_b = 0.01 * jax.random.normal(k2, (PF,), jnp.float32)
    fc2_w = 0.02 * jax.random.normal(k3, (PF, D), jnp.float32)
    fc2_b = 0.01 * jax.random.normal(k4, (D,), jnp.float32)

    ffn = jax.jit(positionwise_feedforward)
    out = jax.block_until_ready(ffn(x, fc1_w, fc1_b, fc2_w, fc2_b))

    ref = _ffn_reference(x, fc1_w, fc1_b, fc2_w, fc2_b)

    assert out.shape == (B, L, D)
    assert bool(jnp.isfinite(out).all())
    assert bool(jnp.allclose(out, ref, rtol=2e-2, atol=2e-2)), (
        float(jnp.max(jnp.abs(out - ref))))
    print("KERNEL_OK")
</pallas_src>

<mosaic_0001>
module attributes {stable_mosaic.version = 11 : i64} {
  func.func @_ffn_kernel(%arg0: i32, %arg1: memref<16x512xf32, #tpu.memory_space<vmem>>, %arg2: memref<512x256xbf16, #tpu.memory_space<vmem>>, %arg3: memref<1x256xf32, #tpu.memory_space<vmem>>, %arg4: memref<256x512xbf16, #tpu.memory_space<vmem>>, %arg5: memref<1x512xf32, #tpu.memory_space<vmem>>, %arg6: memref<16x512xf32, #tpu.memory_space<vmem>>) attributes {dimension_semantics = [#tpu.dimension_semantics<parallel>], iteration_bounds = array<i64: 1>, scalar_prefetch = 0 : i64, scratch_operands = 0 : i64, tpu.core_type = #tpu.core_type<tc>, window_params = [{transform_indices = @transform_0, window_bounds = array<i64: 16, 512>}, {pipeline_mode = #tpu.pipeline_mode<synchronous>, transform_indices = @transform_1, window_bounds = array<i64: 512, 256>}, {pipeline_mode = #tpu.pipeline_mode<synchronous>, transform_indices = @transform_2, window_bounds = array<i64: 1, 256>}, {pipeline_mode = #tpu.pipeline_mode<synchronous>, transform_indices = @transform_3, window_bounds = array<i64: 256, 512>}, {pipeline_mode = #tpu.pipeline_mode<synchronous>, transform_indices = @transform_4, window_bounds = array<i64: 1, 512>}, {transform_indices = @transform_5, window_bounds = array<i64: 16, 512>}]} {
    %c0 = arith.constant 0 : index
    %c0_0 = arith.constant 0 : index
    %0 = vector.load %arg1[%c0, %c0_0] : memref<16x512xf32, #tpu.memory_space<vmem>>, vector<16x512xf32>
    %1 = arith.truncf %0 : vector<16x512xf32> to vector<16x512xbf16>
    %c0_1 = arith.constant 0 : index
    %c0_2 = arith.constant 0 : index
    %2 = vector.load %arg2[%c0_1, %c0_2] : memref<512x256xbf16, #tpu.memory_space<vmem>>, vector<512x256xbf16>
    %cst = arith.constant dense<0.000000e+00> : vector<16x256xf32>
    %3 = tpu.matmul %1, %2, %cst {dimension_numbers = #tpu.dot_dimension_numbers<[1], [0], [0], [1], [0, 0, 1, 1], [], []>} : vector<16x512xbf16>, vector<512x256xbf16>, vector<16x256xf32> -> vector<16x256xf32>
    %c0_3 = arith.constant 0 : index
    %c0_4 = arith.constant 0 : index
    %4 = vector.load %arg3[%c0_3, %c0_4] : memref<1x256xf32, #tpu.memory_space<vmem>>, vector<1x256xf32>
    %5 = vector.broadcast %4 : vector<1x256xf32> to vector<16x256xf32>
    %6 = arith.addf %3, %5 : vector<16x256xf32>
    %cst_5 = arith.constant 0.000000e+00 : f32
    %7 = vector.broadcast %cst_5 : f32 to vector<16x256xf32>
    %8 = arith.maximumf %6, %7 : vector<16x256xf32>
    %9 = arith.truncf %8 : vector<16x256xf32> to vector<16x256xbf16>
    %c0_6 = arith.constant 0 : index
    %c0_7 = arith.constant 0 : index
    %10 = vector.load %arg4[%c0_6, %c0_7] : memref<256x512xbf16, #tpu.memory_space<vmem>>, vector<256x512xbf16>
    %cst_8 = arith.constant dense<0.000000e+00> : vector<16x512xf32>
    %11 = tpu.matmul %9, %10, %cst_8 {dimension_numbers = #tpu.dot_dimension_numbers<[1], [0], [0], [1], [0, 0, 1, 1], [], []>} : vector<16x256xbf16>, vector<256x512xbf16>, vector<16x512xf32> -> vector<16x512xf32>
    %c0_9 = arith.constant 0 : index
    %c0_10 = arith.constant 0 : index
    %12 = vector.load %arg5[%c0_9, %c0_10] : memref<1x512xf32, #tpu.memory_space<vmem>>, vector<1x512xf32>
    %13 = vector.broadcast %12 : vector<1x512xf32> to vector<16x512xf32>
    %14 = arith.addf %11, %13 : vector<16x512xf32>
    %cst_11 = arith.constant 0.000000e+00 : f32
    %15 = vector.broadcast %cst_11 : f32 to vector<16x512xf32>
    %16 = arith.maximumf %14, %15 : vector<16x512xf32>
    %c0_12 = arith.constant 0 : index
    %c0_13 = arith.constant 0 : index
    %17 = vector.load %arg6[%c0_12, %c0_13] : memref<16x512xf32, #tpu.memory_space<vmem>>, vector<16x512xf32>
    tpu.vector_store %arg6[%c0_12, %c0_13], %16 {strides = array<i32>} : memref<16x512xf32, #tpu.memory_space<vmem>>, vector<16x512xf32>,
    return
  }
  func.func @transform_0(%arg0: i32) -> (i32, i32) {
    %c0_i32 = arith.constant 0 : i32
    %c0_i32_0 = arith.constant 0 : i32
    return %arg0, %c0_i32 : i32, i32
  }
  func.func @transform_1(%arg0: i32) -> (i32, i32) {
    %c0_i32 = arith.constant 0 : i32
    %c0_i32_0 = arith.constant 0 : i32
    %c0_i32_1 = arith.constant 0 : i32
    return %c0_i32, %c0_i32_0 : i32, i32
  }
  func.func @transform_2(%arg0: i32) -> (i32, i32) {
    %c0_i32 = arith.constant 0 : i32
    %c0_i32_0 = arith.constant 0 : i32
    %c0_i32_1 = arith.constant 0 : i32
    return %c0_i32, %c0_i32_0 : i32, i32
  }
  func.func @transform_3(%arg0: i32) -> (i32, i32) {
    %c0_i32 = arith.constant 0 : i32
    %c0_i32_0 = arith.constant 0 : i32
    %c0_i32_1 = arith.constant 0 : i32
    return %c0_i32, %c0_i32_0 : i32, i32
  }
  func.func @transform_4(%arg0: i32) -> (i32, i32) {
    %c0_i32 = arith.constant 0 : i32
    %c0_i32_0 = arith.constant 0 : i32
    %c0_i32_1 = arith.constant 0 : i32
    return %c0_i32, %c0_i32_0 : i32, i32
  }
  func.func @transform_5(%arg0: i32) -> (i32, i32) {
    %c0_i32 = arith.constant 0 : i32
    %c0_i32_0 = arith.constant 0 : i32
    return %arg0, %c0_i32 : i32, i32
  }
}

</mosaic_0001>

<llo_original>
// kernel: positionwise_feedforward.1
$region0: #{positionwise_feedforward.1}
  #allocation0 [shape = 'u32[]', space=smem, size = 0x4, offset = 0x4, fixed_abs, tag = 'smem constant byte address 0x4 - core index']
  #allocation1 [shape = 'u32[72,128]{1,0:T(1,128)}', space=vmem, size = 0x9000, scoped, tag = 'internal scratch']
  %s0 = inlined_call_operand.vmem [shape: f32[16,512], index: 0, kind: input, shape index: {}]
  %s1 = inlined_call_operand.vmem [shape: bf16[512,256], index: 1, kind: input, shape index: {}]
  %s2 = inlined_call_operand.vmem [shape: f32[1,256], index: 2, kind: input, shape index: {}]
  %s3 = inlined_call_operand.vmem [shape: bf16[256,512], index: 3, kind: input, shape index: {}]
  %s4 = inlined_call_operand.vmem [shape: f32[1,512], index: 4, kind: input, shape index: {}]
  %s5 = inlined_call_operand.hbm [shape: f32[16,512], index: 5, kind: output, shape index: {}]
  %s6 = sld [smem:[#allocation0]]
  $region30: #{positionwise_feedforward.1} parent=0
    _
  %s8 = ssub.s32 1, %s6
  %s9 = scalar_select 0, %s8, %s6
  $region1: #{positionwise_feedforward.1} parent=0
    #allocation2 [shape = 'u8[32768]{0}', space=vmem, size = 0x8000, scoped, tag = 'output window, operand 0, single buffered']
    #allocation3 [shape = 's32[1]{0}', space=sflag, size = 0x4, scoped, tag = 'scoped memory for positionwise_feedforward.1']
    %10 = vsyncpa [#allocation3], 0
    // Predicated region
    $region2: #{positionwise_feedforward.1} parent=1 // pred_check
      _
    $region3: #{positionwise_feedforward.1} parent=1 // pred_check_branch
      %12 = sbr.rel (0) target = $region5
    $region4: #{positionwise_feedforward.1} parent=1 // pred_region
      _
    $region5: #{positionwise_feedforward.1} parent=1 // pred_fallthru
      _
    // Predicated region
    $region6: #{positionwise_feedforward.1} parent=1 // pred_check
      _
    $region7: #{positionwise_feedforward.1} parent=1 // pred_check_branch
      %14 = sbr.rel (0) target = $region9
    $region8: #{positionwise_feedforward.1} parent=1 // pred_region
      _
    $region9: #{positionwise_feedforward.1} parent=1 // pred_fallthru
      _
    // Predicated region
    $region10: #{positionwise_feedforward.1} parent=1 // pred_check
      _
    $region11: #{positionwise_feedforward.1} parent=1 // pred_check_branch
      %16 = sbr.rel (0) target = $region13
    $region12: #{positionwise_feedforward.1} parent=1 // pred_region
      _
    $region13: #{positionwise_feedforward.1} parent=1 // pred_fallthru
      _
    // Predicated region
    $region14: #{positionwise_feedforward.1} parent=1 // pred_check
      _
    $region15: #{positionwise_feedforward.1} parent=1 // pred_check_branch
      %18 = sbr.rel (0) target = $region17
    $region16: #{positionwise_feedforward.1} parent=1 // pred_region
      _
    $region17: #{positionwise_feedforward.1} parent=1 // pred_fallthru
      _
    // Predicated region
    $region18: #{positionwise_feedforward.1} parent=1 // pred_check
      _
    $region19: #{positionwise_feedforward.1} parent=1 // pred_check_branch
      %20 = sbr.rel (0) target = $region21
    $region20: #{positionwise_feedforward.1} parent=1 // pred_region
      _
    $region21: #{positionwise_feedforward.1} parent=1 // pred_fallthru
      _
    %v21 = vld [vmem:[%s0] sm:$0xff]
    %v22 = vld [vmem:[%s0 + $0x8] sm:$0xff]
    %v23 = vld [vmem:[%s0 + $0x10] sm:$0xff]
    %v24 = vld [vmem:[%s0 + $0x18] sm:$0xff]
    %v25 = vld [vmem:[%s0 + $0x20] sm:$0xff]
    %v26 = vld [vmem:[%s0 + $0x28] sm:$0xff]
    %v27 = vld [vmem:[%s0 + $0x30] sm:$0xff]
    %v28 = vld [vmem:[%s0 + $0x38] sm:$0xff]
    %v29 = vpack.c.bf16 %v25, %v21
    %v30 = vpack.c.bf16 %v26, %v22
    %v31 = vpack.c.bf16 %v27, %v23
    %v32 = vpack.c.bf16 %v28, %v24
    %v33 = vld [vmem:[%s1] sm:$0xff]
    %v34 = vld [vmem:[%s1 + $0x8] sm:$0xff]
    %v35 = vld [vmem:[%s1 + $0x10] sm:$0xff]
    %v36 = vld [vmem:[%s1 + $0x18] sm:$0xff]
    %v37 = vld [vmem:[%s1 + $0x20] sm:$0xff]
    %v38 = vld [vmem:[%s1 + $0x28] sm:$0xff]
    %v39 = vld [vmem:[%s1 + $0x30] sm:$0xff]
    %v40 = vld [vmem:[%s1 + $0x38] sm:$0xff]
    %v41 = vld [vmem:[%s1 + $0x40] sm:$0xff]
    %v42 = vld [vmem:[%s1 + $0x48] sm:$0xff]
    %v43 = vld [vmem:[%s1 + $0x50] sm:$0xff]
    %v44 = vld [vmem:[%s1 + $0x58] sm:$0xff]
    %v45 = vld [vmem:[%s1 + $0x60] sm:$0xff]
    %v46 = vld [vmem:[%s1 + $0x68] sm:$0xff]
    %v47 = vld [vmem:[%s1 + $0x70] sm:$0xff]
    %v48 = vld [vmem:[%s1 + $0x78] sm:$0xff]
    %v49 = vld [vmem:[%s1 + $0x80] sm:$0xff]
    %v50 = vld [vmem:[%s1 + $0x88] sm:$0xff]
    %v51 = vld [vmem:[%s1 + $0x90] sm:$0xff]
    %v52 = vld [vmem:[%s1 + $0x98] sm:$0xff]
    %v53 = vld [vmem:[%s1 + $0xa0] sm:$0xff]
    %v54 = vld [vmem:[%s1 + $0xa8] sm:$0xff]
    %v55 = vld [vmem:[%s1 + $0xb0] sm:$0xff]
    %v56 = vld [vmem:[%s1 + $0xb8] sm:$0xff]
    %v57 = vld [vmem:[%s1 + $0xc0] sm:$0xff]
    %v58 = vld [vmem:[%s1 + $0xc8] sm:$0xff]
    %v59 = vld [vmem:[%s1 + $0xd0] sm:$0xff]
    %v60 = vld [vmem:[%s1 + $0xd8] sm:$0xff]
    %v61 = vld [vmem:[%s1 + $0xe0] sm:$0xff]
    %v62 = vld [vmem:[%s1 + $0xe8] sm:$0xff]
    %v63 = vld [vmem:[%s1 + $0xf0] sm:$0xff]
    %v64 = vld [vmem:[%s1 + $0xf8] sm:$0xff]
    %v65 = vld [vmem:[%s1 + $0x100] sm:$0xff]
    %v66 = vld [vmem:[%s1 + $0x108] sm:$0xff]
    %v67 = vld [vmem:[%s1 + $0x110] sm:$0xff]
    %v68 = vld [vmem:[%s1 + $0x118] sm:$0xff]
    %v69 = vld [vmem:[%s1 + $0x120] sm:$0xff]
    %v70 = vld [vmem:[%s1 + $0x128] sm:$0xff]
    %v71 = vld [vmem:[%s1 + $0x130] sm:$0xff]
    %v72 = vld [vmem:[%s1 + $0x138] sm:$0xff]
    %v73 = vld [vmem:[%s1 + $0x140] sm:$0xff]
    %v74 = vld [vmem:[%s1 + $0x148] sm:$0xff]
    %v75 = vld [vmem:[%s1 + $0x150] sm:$0xff]
    %v76 = vld [vmem:[%s1 + $0x158] sm:$0xff]
    %v77 = vld [vmem:[%s1 + $0x160] sm:$0xff]
    %v78 = vld [vmem:[%s1 + $0x168] sm:$0xff]
    %v79 = vld [vmem:[%s1 + $0x170] sm:$0xff]
    %v80 = vld [vmem:[%s1 + $0x178] sm:$0xff]
    %v81 = vld [vmem:[%s1 + $0x180] sm:$0xff]
    %v82 = vld [vmem:[%s1 + $0x188] sm:$0xff]
    %v83 = vld [vmem:[%s1 + $0x190] sm:$0xff]
    %v84 = vld [vmem:[%s1 + $0x198] sm:$0xff]
    %v85 = vld [vmem:[%s1 + $0x1a0] sm:$0xff]
    %v86 = vld [vmem:[%s1 + $0x1a8] sm:$0xff]
    %v87 = vld [vmem:[%s1 + $0x1b0] sm:$0xff]
    %v88 = vld [vmem:[%s1 + $0x1b8] sm:$0xff]
    %v89 = vld [vmem:[%s1 + $0x1c0] sm:$0xff]
    %v90 = vld [vmem:[%s1 + $0x1c8] sm:$0xff]
    %v91 = vld [vmem:[%s1 + $0x1d0] sm:$0xff]
    %v92 = vld [vmem:[%s1 + $0x1d8] sm:$0xff]
    %v93 = vld [vmem:[%s1 + $0x1e0] sm:$0xff]
    %v94 = vld [vmem:[%s1 + $0x1e8] sm:$0xff]
    %v95 = vld [vmem:[%s1 + $0x1f0] sm:$0xff]
    %v96 = vld [vmem:[%s1 + $0x1f8] sm:$0xff]
    %v97 = vld [vmem:[%s2] sm:$0x3]
    %v99 = vperm.slane %v97, 0
    %v100 = vperm.slane %v97, 1
    %v167 = vunpack.c.l.b16 %v33
    %v168 = vunpack.c.h.b16 %v33
    %v169 = vunpack.c.l.b16 %v34
    %v170 = vunpack.c.h.b16 %v34
    %v171 = vunpack.c.l.b16 %v35
    %v172 = vunpack.c.h.b16 %v35
    %v173 = vunpack.c.l.b16 %v36
    %v174 = vunpack.c.h.b16 %v36
    %v175 = vunpack.c.l.b16 %v37
    %v176 = vunpack.c.h.b16 %v37
    %v177 = vunpack.c.l.b16 %v38
    %v178 = vunpack.c.h.b16 %v38
    %v179 = vunpack.c.l.b16 %v39
    %v180 = vunpack.c.h.b16 %v39
    %v181 = vunpack.c.l.b16 %v40
    %v182 = vunpack.c.h.b16 %v40
    %v183 = vunpack.c.l.b16 %v41
    %v184 = vunpack.c.h.b16 %v41
    %v185 = vunpack.c.l.b16 %v42
    %v186 = vunpack.c.h.b16 %v42
    %v187 = vunpack.c.l.b16 %v43
    %v188 = vunpack.c.h.b16 %v43
    %v189 = vunpack.c.l.b16 %v44
    %v190 = vunpack.c.h.b16 %v44
    %v191 = vunpack.c.l.b16 %v45
    %v192 = vunpack.c.h.b16 %v45
    %v193 = vunpack.c.l.b16 %v46
    %v194 = vunpack.c.h.b16 %v46
    %v195 = vunpack.c.l.b16 %v47
    %v196 = vunpack.c.h.b16 %v47
    %v197 = vunpack.c.l.b16 %v48
    %v198 = vunpack.c.h.b16 %v48
    %v199 = vunpack.c.l.b16 %v49
    %v200 = vunpack.c.h.b16 %v49
    %v201 = vunpack.c.l.b16 %v50
    %v202 = vunpack.c.h.b16 %v50
    %v203 = vunpack.c.l.b16 %v51
    %v204 = vunpack.c.h.b16 %v51
    %v205 = vunpack.c.l.b16 %v52
    %v206 = vunpack.c.h.b16 %v52
    %v207 = vunpack.c.l.b16 %v53
    %v208 = vunpack.c.h.b16 %v53
    %v209 = vunpack.c.l.b16 %v54
    %v210 = vunpack.c.h.b16 %v54
    %v211 = vunpack.c.l.b16 %v55
    %v212 = vunpack.c.h.b16 %v55
    %v213 = vunpack.c.l.b16 %v56
    %v214 = vunpack.c.h.b16 %v56
    %v215 = vunpack.c.l.b16 %v57
    %v216 = vunpack.c.h.b16 %v57
    %v217 = vunpack.c.l.b16 %v58
    %v218 = vunpack.c.h.b16 %v58
    %v219 = vunpack.c.l.b16 %v59
    %v220 = vunpack.c.h.b16 %v59
    %v221 = vunpack.c.l.b16 %v60
    %v222 = vunpack.c.h.b16 %v60
    %v223 = vunpack.c.l.b16 %v61
    %v224 = vunpack.c.h.b16 %v61
    %v225 = vunpack.c.l.b16 %v62
    %v226 = vunpack.c.h.b16 %v62
    %v227 = vunpack.c.l.b16 %v63
    %v228 = vunpack.c.h.b16 %v63
    %v229 = vunpack.c.l.b16 %v64
    %v230 = vunpack.c.h.b16 %v64
    %v231 = vunpack.c.l.b16 %v65
    %v232 = vunpack.c.h.b16 %v65
    %v233 = vunpack.c.l.b16 %v66
    %v234 = vunpack.c.h.b16 %v66
    %v235 = vunpack.c.l.b16 %v67
    %v236 = vunpack.c.h.b16 %v67
    %v237 = vunpack.c.l.b16 %v68
    %v238 = vunpack.c.h.b16 %v68
    %v239 = vunpack.c.l.b16 %v69
    %v240 = vunpack.c.h.b16 %v69
    %v241 = vunpack.c.l.b16 %v70
    %v242 = vunpack.c.h.b16 %v70
    %v243 = vunpack.c.l.b16 %v71
    %v244 = vunpack.c.h.b16 %v71
    %v245 = vunpack.c.l.b16 %v72
    %v246 = vunpack.c.h.b16 %v72
    %v247 = vunpack.c.l.b16 %v73
    %v248 = vunpack.c.h.b16 %v73
    %v249 = vunpack.c.l.b16 %v74
    %v250 = vunpack.c.h.b16 %v74
    %v251 = vunpack.c.l.b16 %v75
    %v252 = vunpack.c.h.b16 %v75
    %v253 = vunpack.c.l.b16 %v76
    %v254 = vunpack.c.h.b16 %v76
    %v255 = vunpack.c.l.b16 %v77
    %v256 = vunpack.c.h.b16 %v77
    %v257 = vunpack.c.l.b16 %v78
    %v258 = vunpack.c.h.b16 %v78
    %v259 = vunpack.c.l.b16 %v79
    %v260 = vunpack.c.h.b16 %v79
    %v261 = vunpack.c.l.b16 %v80
    %v262 = vunpack.c.h.b16 %v80
    %v263 = vunpack.c.l.b16 %v81
    %v264 = vunpack.c.h.b16 %v81
    %v265 = vunpack.c.l.b16 %v82
    %v266 = vunpack.c.h.b16 %v82
    %v267 = vunpack.c.l.b16 %v83
    %v268 = vunpack.c.h.b16 %v83
    %v269 = vunpack.c.l.b16 %v84
    %v270 = vunpack.c.h.b16 %v84
    %v271 = vunpack.c.l.b16 %v85
    %v272 = vunpack.c.h.b16 %v85
    %v273 = vunpack.c.l.b16 %v86
    %v274 = vunpack.c.h.b16 %v86
    %v275 = vunpack.c.l.b16 %v87
    %v276 = vunpack.c.h.b16 %v87
    %v277 = vunpack.c.l.b16 %v88
    %v278 = vunpack.c.h.b16 %v88
    %v279 = vunpack.c.l.b16 %v89
    %v280 = vunpack.c.h.b16 %v89
    %v281 = vunpack.c.l.b16 %v90
    %v282 = vunpack.c.h.b16 %v90
    %v283 = vunpack.c.l.b16 %v91
    %v284 = vunpack.c.h.b16 %v91
    %v285 = vunpack.c.l.b16 %v92
    %v286 = vunpack.c.h.b16 %v92
    %v287 = vunpack.c.l.b16 %v93
    %v288 = vunpack.c.h.b16 %v93
    %v289 = vunpack.c.l.b16 %v94
    %v290 = vunpack.c.h.b16 %v94
    %v291 = vunpack.c.l.b16 %v95
    %v292 = vunpack.c.h.b16 %v95
    %v293 = vunpack.c.l.b16 %v96
    %v294 = vunpack.c.h.b16 %v96
    %v295 = vpack.c.b16 %v169, %v167
    %v296 = vpack.c.b16 %v170, %v168
    %v297 = vpack.c.b16 %v173, %v171
    %v298 = vpack.c.b16 %v174, %v172
    %v299 = vpack.c.b16 %v177, %v175
    %v300 = vpack.c.b16 %v178, %v176
    %v301 = vpack.c.b16 %v181, %v179
    %v302 = vpack.c.b16 %v182, %v180
    %v303 = vpack.c.b16 %v185, %v183
    %v304 = vpack.c.b16 %v186, %v184
    %v305 = vpack.c.b16 %v189, %v187
    %v306 = vpack.c.b16 %v190, %v188
    %v307 = vpack.c.b16 %v193, %v191
    %v308 = vpack.c.b16 %v194, %v192
    %v309 = vpack.c.b16 %v197, %v195
    %v310 = vpack.c.b16 %v198, %v196
    %v311 = vpack.c.b16 %v201, %v199
    %v312 = vpack.c.b16 %v202, %v200
    %v313 = vpack.c.b16 %v205, %v203
    %v314 = vpack.c.b16 %v206, %v204
    %v315 = vpack.c.b16 %v209, %v207
    %v316 = vpack.c.b16 %v210, %v208
    %v317 = vpack.c.b16 %v213, %v211
    %v318 = vpack.c.b16 %v214, %v212
    %v319 = vpack.c.b16 %v217, %v215
    %v320 = vpack.c.b16 %v218, %v216
    %v321 = vpack.c.b16 %v221, %v219
    %v322 = vpack.c.b16 %v222, %v220
    %v323 = vpack.c.b16 %v225, %v223
    %v324 = vpack.c.b16 %v226, %v224
    %v325 = vpack.c.b16 %v229, %v227
    %v326 = vpack.c.b16 %v230, %v228
    %v327 = vpack.c.b16 %v233, %v231
    %v328 = vpack.c.b16 %v234, %v232
    %v329 = vpack.c.b16 %v237, %v235
    %v330 = vpack.c.b16 %v238, %v236
    %v331 = vpack.c.b16 %v241, %v239
    %v332 = vpack.c.b16 %v242, %v240
    %v333 = vpack.c.b16 %v245, %v243
    %v334 = vpack.c.b16 %v246, %v244
    %v335 = vpack.c.b16 %v249, %v247
    %v336 = vpack.c.b16 %v250, %v248
    %v337 = vpack.c.b16 %v253, %v251
    %v338 = vpack.c.b16 %v254, %v252
    %v339 = vpack.c.b16 %v257, %v255
    %v340 = vpack.c.b16 %v258, %v256
    %v341 = vpack.c.b16 %v261, %v259
    %v342 = vpack.c.b16 %v262, %v260
    %v343 = vpack.c.b16 %v265, %v263
    %v344 = vpack.c.b16 %v266, %v264
    %v345 = vpack.c.b16 %v269, %v267
    %v346 = vpack.c.b16 %v270, %v268
    %v347 = vpack.c.b16 %v273, %v271
    %v348 = vpack.c.b16 %v274, %v272
    %v349 = vpack.c.b16 %v277, %v275
    %v350 = vpack.c.b16 %v278, %v276
    %v351 = vpack.c.b16 %v281, %v279
    %v352 = vpack.c.b16 %v282, %v280
    %v353 = vpack.c.b16 %v285, %v283
    %v354 = vpack.c.b16 %v286, %v284
    %v355 = vpack.c.b16 %v289, %v287
    %v356 = vpack.c.b16 %v290, %v288
    %v357 = vpack.c.b16 %v293, %v291
    %v358 = vpack.c.b16 %v294, %v292
    %423 = vmatpush.bf16.msra.mxu0 %v309
    %424 = vmatpush.bf16.msra.mxu0 %v307
    %425 = vmatpush.bf16.msra.mxu0 %v305
    %426 = vmatpush.bf16.msra.mxu0 %v303
    %427 = vmatpush.bf16.msra.mxu0 %v301
    %428 = vmatpush.bf16.msra.mxu0 %v299
    %429 = vmatpush.bf16.msra.mxu0 %v297
    %430 = vmatpush.bf16.msra.mxu0 %v295
    %431 = vmatmul.bf16.gmra.mxu0 %v29
    %v432 = vpop.f32.mrf.mxu0
    %v433 = vadd.f32 %v99, %v432
    %v434 = vpop.f32.mrf.mxu0
    %v435 = vadd.f32 %v99, %v434
    %436 = vdwg.mxu0
    %437 = vmatpush.bf16.msra.mxu0 %v325
    %438 = vmatpush.bf16.msra.mxu0 %v323
    %439 = vmatpush.bf16.msra.mxu0 %v321
    %440 = vmatpush.bf16.msra.mxu0 %v319
    %441 = vmatpush.bf16.msra.mxu0 %v317
    %442 = vmatpush.bf16.msra.mxu0 %v315
    %443 = vmatpush.bf16.msra.mxu0 %v313
    %444 = vmatpush.bf16.msra.mxu0 %v311
    %445 = vmatmul.bf16.gmra.mxu0 %v30
    %v446 = vpop.f32.mrf.mxu0
    %v447 = vadd.f32 %v433, %v446
    %v448 = vpop.f32.mrf.mxu0
    %v449 = vadd.f32 %v435, %v448
    %450 = vdwg.mxu0
    %451 = vmatpush.bf16.msra.mxu0 %v341
    %452 = vmatpush.bf16.msra.mxu0 %v339
    %453 = vmatpush.bf16.msra.mxu0 %v337
    %454 = vmatpush.bf16.msra.mxu0 %v335
    %455 = vmatpush.bf16.msra.mxu0 %v333
    %456 = vmatpush.bf16.msra.mxu0 %v331
    %457 = vmatpush.bf16.msra.mxu0 %v329
    %458 = vmatpush.bf16.msra.mxu0 %v327
    %459 = vmatmul.bf16.gmra.mxu0 %v31
    %v460 = vpop.f32.mrf.mxu0
    %v461 = vadd.f32 %v447, %v460
    %v462 = vpop.f32.mrf.mxu0
    %v463 = vadd.f32 %v449, %v462
    %464 = vdwg.mxu0
    %465 = vmatpush.bf16.msra.mxu0 %v357
    %466 = vmatpush.bf16.msra.mxu0 %v355
    %467 = vmatpush.bf16.msra.mxu0 %v353
    %468 = vmatpush.bf16.msra.mxu0 %v351
    %469 = vmatpush.bf16.msra.mxu0 %v349
    %470 = vmatpush.bf16.msra.mxu0 %v347
    %471 = vmatpush.bf16.msra.mxu0 %v345
    %472 = vmatpush.bf16.msra.mxu0 %v343
    %473 = vmatmul.bf16.gmra.mxu0 %v32
    %v474 = vpop.f32.mrf.mxu0
    %v475 = vadd.f32 %v461, %v474
    %v476 = vpop.f32.mrf.mxu0
    %v477 = vadd.f32 %v463, %v476
    %478 = vdwg.mxu0
    %479 = vmatpush.bf16.msra.mxu0 %v310
    %480 = vmatpush.bf16.msra.mxu0 %v308
    %481 = vmatpush.bf16.msra.mxu0 %v306
    %482 = vmatpush.bf16.msra.mxu0 %v304
    %483 = vmatpush.bf16.msra.mxu0 %v302
    %484 = vmatpush.bf16.msra.mxu0 %v300
    %485 = vmatpush.bf16.msra.mxu0 %v298
    %486 = vmatpush.bf16.msra.mxu0 %v296
    %487 = vmatmul.bf16.gmra.mxu0 %v29
    %v488 = vpop.f32.mrf.mxu0
    %v489 = vadd.f32 %v100, %v488
    %v490 = vpop.f32.mrf.mxu0
    %v491 = vadd.f32 %v100, %v490
    %492 = vdwg.mxu0
    %493 = vmatpush.bf16.msra.mxu0 %v326
    %494 = vmatpush.bf16.msra.mxu0 %v324
    %495 = vmatpush.bf16.msra.mxu0 %v322
    %496 = vmatpush.bf16.msra.mxu0 %v320
    %497 = vmatpush.bf16.msra.mxu0 %v318
    %498 = vmatpush.bf16.msra.mxu0 %v316
    %499 = vmatpush.bf16.msra.mxu0 %v314
    %500 = vmatpush.bf16.msra.mxu0 %v312
    %501 = vmatmul.bf16.gmra.mxu0 %v30
    %v502 = vpop.f32.mrf.mxu0
    %v503 = vadd.f32 %v489, %v502
    %v504 = vpop.f32.mrf.mxu0
    %v505 = vadd.f32 %v491, %v504
    %506 = vdwg.mxu0
    %507 = vmatpush.bf16.msra.mxu0 %v342
    %508 = vmatpush.bf16.msra.mxu0 %v340
    %509 = vmatpush.bf16.msra.mxu0 %v338
    %510 = vmatpush.bf16.msra.mxu0 %v336
    %511 = vmatpush.bf16.msra.mxu0 %v334
    %512 = vmatpush.bf16.msra.mxu0 %v332
    %513 = vmatpush.bf16.msra.mxu0 %v330
    %514 = vmatpush.bf16.msra.mxu0 %v328
    %515 = vmatmul.bf16.gmra.mxu0 %v31
    %v516 = vpop.f32.mrf.mxu0
    %v517 = vadd.f32 %v503, %v516
    %v518 = vpop.f32.mrf.mxu0
    %v519 = vadd.f32 %v505, %v518
    %520 = vdwg.mxu0
    %521 = vmatpush.bf16.msra.mxu0 %v358
    %522 = vmatpush.bf16.msra.mxu0 %v356
    %523 = vmatpush.bf16.msra.mxu0 %v354
    %524 = vmatpush.bf16.msra.mxu0 %v352
    %525 = vmatpush.bf16.msra.mxu0 %v350
    %526 = vmatpush.bf16.msra.mxu0 %v348
    %527 = vmatpush.bf16.msra.mxu0 %v346
    %528 = vmatpush.bf16.msra.mxu0 %v344
    %529 = vmatmul.bf16.gmra.mxu0 %v32
    %v530 = vpop.f32.mrf.mxu0
    %v531 = vadd.f32 %v517, %v530
    %v532 = vpop.f32.mrf.mxu0
    %v533 = vadd.f32 %v519, %v532
    %534 = vdwg.mxu0
    %v535 = vmax.f32 %v475, 0.0
    %v536 = vmax.f32 %v531, 0.0
    %v537 = vmax.f32 %v477, 0.0
    %v538 = vmax.f32 %v533, 0.0
    %v539 = vpack.c.bf16 %v537, %v535
    %v540 = vpack.c.bf16 %v538, %v536
    %v541 = vld [vmem:[%s3] sm:$0xff]
    %v542 = vld [vmem:[%s3 + $0x8] sm:$0xff]
    %v543 = vld [vmem:[%s3 + $0x10] sm:$0xff]
    %v544 = vld [vmem:[%s3 + $0x18] sm:$0xff]
    %v545 = vld [vmem:[%s3 + $0x20] sm:$0xff]
    %v546 = vld [vmem:[%s3 + $0x28] sm:$0xff]
    %v547 = vld [vmem:[%s3 + $0x30] sm:$0xff]
    %v548 = vld [vmem:[%s3 + $0x38] sm:$0xff]
    %v549 = vld [vmem:[%s3 + $0x40] sm:$0xff]
    %v550 = vld [vmem:[%s3 + $0x48] sm:$0xff]
    %v551 = vld [vmem:[%s3 + $0x50] sm:$0xff]
    %v552 = vld [vmem:[%s3 + $0x58] sm:$0xff]
    %v553 = vld [vmem:[%s3 + $0x60] sm:$0xff]
    %v554 = vld [vmem:[%s3 + $0x68] sm:$0xff]
    %v555 = vld [vmem:[%s3 + $0x70] sm:$0xff]
    %v556 = vld [vmem:[%s3 + $0x78] sm:$0xff]
    %v557 = vld [vmem:[%s3 + $0x80] sm:$0xff]
    %v558 = vld [vmem:[%s3 + $0x88] sm:$0xff]
    %v559 = vld [vmem:[%s3 + $0x90] sm:$0xff]
    %v560 = vld [vmem:[%s3 + $0x98] sm:$0xff]
    %v561 = vld [vmem:[%s3 + $0xa0] sm:$0xff]
    %v562 = vld [vmem:[%s3 + $0xa8] sm:$0xff]
    %v563 = vld [vmem:[%s3 + $0xb0] sm:$0xff]
    %v564 = vld [vmem:[%s3 + $0xb8] sm:$0xff]
    %v565 = vld [vmem:[%s3 + $0xc0] sm:$0xff]
    %v566 = vld [vmem:[%s3 + $0xc8] sm:$0xff]
    %v567 = vld [vmem:[%s3 + $0xd0] sm:$0xff]
    %v568 = vld [vmem:[%s3 + $0xd8] sm:$0xff]
    %v569 = vld [vmem:[%s3 + $0xe0] sm:$0xff]
    %v570 = vld [vmem:[%s3 + $0xe8] sm:$0xff]
    %v571 = vld [vmem:[%s3 + $0xf0] sm:$0xff]
    %v572 = vld [vmem:[%s3 + $0xf8] sm:$0xff]
    %v573 = vld [vmem:[%s3 + $0x100] sm:$0xff]
    %v574 = vld [vmem:[%s3 + $0x108] sm:$0xff]
    %v575 = vld [vmem:[%s3 + $0x110] sm:$0xff]
    %v576 = vld [vmem:[%s3 + $0x118] sm:$0xff]
    %v577 = vld [vmem:[%s3 + $0x120] sm:$0xff]
    %v578 = vld [vmem:[%s3 + $0x128] sm:$0xff]
    %v579 = vld [vmem:[%s3 + $0x130] sm:$0xff]
    %v580 = vld [vmem:[%s3 + $0x138] sm:$0xff]
    %v581 = vld [vmem:[%s3 + $0x140] sm:$0xff]
    %v582 = vld [vmem:[%s3 + $0x148] sm:$0xff]
    %v583 = vld [vmem:[%s3 + $0x150] sm:$0xff]
    %v584 = vld [vmem:[%s3 + $0x158] sm:$0xff]
    %v585 = vld [vmem:[%s3 + $0x160] sm:$0xff]
    %v586 = vld [vmem:[%s3 + $0x168] sm:$0xff]
    %v587 = vld [vmem:[%s3 + $0x170] sm:$0xff]
    %v588 = vld [vmem:[%s3 + $0x178] sm:$0xff]
    %v589 = vld [vmem:[%s3 + $0x180] sm:$0xff]
    %v590 = vld [vmem:[%s3 + $0x188] sm:$0xff]
    %v591 = vld [vmem:[%s3 + $0x190] sm:$0xff]
    %v592 = vld [vmem:[%s3 + $0x198] sm:$0xff]
    %v593 = vld [vmem:[%s3 + $0x1a0] sm:$0xff]
    %v594 = vld [vmem:[%s3 + $0x1a8] sm:$0xff]
    %v595 = vld [vmem:[%s3 + $0x1b0] sm:$0xff]
    %v596 = vld [vmem:[%s3 + $0x1b8] sm:$0xff]
    %v597 = vld [vmem:[%s3 + $0x1c0] sm:$0xff]
    %v598 = vld [vmem:[%s3 + $0x1c8] sm:$0xff]
    %v599 = vld [vmem:[%s3 + $0x1d0] sm:$0xff]
    %v600 = vld [vmem:[%s3 + $0x1d8] sm:$0xff]
    %v601 = vld [vmem:[%s3 + $0x1e0] sm:$0xff]
    %v602 = vld [vmem:[%s3 + $0x1e8] sm:$0xff]
    %v603 = vld [vmem:[%s3 + $0x1f0] sm:$0xff]
    %v604 = vld [vmem:[%s3 + $0x1f8] sm:$0xff]
    %v605 = vld [vmem:[%s4] sm:$0xf]
    %v607 = vperm.slane %v605, 0
    %v608 = vperm.slane %v605, 1
    %v609 = vperm.slane %v605, 2
    %v610 = vperm.slane %v605, 3
    %v679 = vunpack.c.l.b16 %v541
    %v680 = vunpack.c.h.b16 %v541
    %v681 = vunpack.c.l.b16 %v542
    %v682 = vunpack.c.h.b16 %v542
    %v683 = vunpack.c.l.b16 %v543
    %v684 = vunpack.c.h.b16 %v543
    %v685 = vunpack.c.l.b16 %v544
    %v686 = vunpack.c.h.b16 %v544
    %v687 = vunpack.c.l.b16 %v545
    %v688 = vunpack.c.h.b16 %v545
    %v689 = vunpack.c.l.b16 %v546
    %v690 = vunpack.c.h.b16 %v546
    %v691 = vunpack.c.l.b16 %v547
    %v692 = vunpack.c.h.b16 %v547
    %v693 = vunpack.c.l.b16 %v548
    %v694 = vunpack.c.h.b16 %v548
    %v695 = vunpack.c.l.b16 %v549
    %v696 = vunpack.c.h.b16 %v549
    %v697 = vunpack.c.l.b16 %v550
    %v698 = vunpack.c.h.b16 %v550
    %v699 = vunpack.c.l.b16 %v551
    %v700 = vunpack.c.h.b16 %v551
    %v701 = vunpack.c.l.b16 %v552
    %v702 = vunpack.c.h.b16 %v552
    %v703 = vunpack.c.l.b16 %v553
    %v704 = vunpack.c.h.b16 %v553
    %v705 = vunpack.c.l.b16 %v554
    %v706 = vunpack.c.h.b16 %v554
    %v707 = vunpack.c.l.b16 %v555
    %v708 = vunpack.c.h.b16 %v555
    %v709 = vunpack.c.l.b16 %v556
    %v710 = vunpack.c.h.b16 %v556
    %v711 = vunpack.c.l.b16 %v557
    %v712 = vunpack.c.h.b16 %v557
    %v713 = vunpack.c.l.b16 %v558
    %v714 = vunpack.c.h.b16 %v558
    %v715 = vunpack.c.l.b16 %v559
    %v716 = vunpack.c.h.b16 %v559
    %v717 = vunpack.c.l.b16 %v560
    %v718 = vunpack.c.h.b16 %v560
    %v719 = vunpack.c.l.b16 %v561
    %v720 = vunpack.c.h.b16 %v561
    %v721 = vunpack.c.l.b16 %v562
    %v722 = vunpack.c.h.b16 %v562
    %v723 = vunpack.c.l.b16 %v563
    %v724 = vunpack.c.h.b16 %v563
    %v725 = vunpack.c.l.b16 %v564
    %v726 = vunpack.c.h.b16 %v564
    %v727 = vunpack.c.l.b16 %v565
    %v728 = vunpack.c.h.b16 %v565
    %v729 = vunpack.c.l.b16 %v566
    %v730 = vunpack.c.h.b16 %v566
    %v731 = vunpack.c.l.b16 %v567
    %v732 = vunpack.c.h.b16 %v567
    %v733 = vunpack.c.l.b16 %v568
    %v734 = vunpack.c.h.b16 %v568
    %v735 = vunpack.c.l.b16 %v569
    %v736 = vunpack.c.h.b16 %v569
    %v737 = vunpack.c.l.b16 %v570
    %v738 = vunpack.c.h.b16 %v570
    %v739 = vunpack.c.l.b16 %v571
    %v740 = vunpack.c.h.b16 %v571
    %v741 = vunpack.c.l.b16 %v572
    %v742 = vunpack.c.h.b16 %v572
    %v743 = vunpack.c.l.b16 %v573
    %v744 = vunpack.c.h.b16 %v573
    %v745 = vunpack.c.l.b16 %v574
    %v746 = vunpack.c.h.b16 %v574
    %v747 = vunpack.c.l.b16 %v575
    %v748 = vunpack.c.h.b16 %v575
    %v749 = vunpack.c.l.b16 %v576
    %v750 = vunpack.c.h.b16 %v576
    %v751 = vunpack.c.l.b16 %v577
    %v752 = vunpack.c.h.b16 %v577
    %v753 = vunpack.c.l.b16 %v578
    %v754 = vunpack.c.h.b16 %v578
    %v755 = vunpack.c.l.b16 %v579
    %v756 = vunpack.c.h.b16 %v579
    %v757 = vunpack.c.l.b16 %v580
    %v758 = vunpack.c.h.b16 %v580
    %v759 = vunpack.c.l.b16 %v581
    %v760 = vunpack.c.h.b16 %v581
    %v761 = vunpack.c.l.b16 %v582
    %v762 = vunpack.c.h.b16 %v582
    %v763 = vunpack.c.l.b16 %v583
    %v764 = vunpack.c.h.b16 %v583
    %v765 = vunpack.c.l.b16 %v584
    %v766 = vunpack.c.h.b16 %v584
    %v767 = vunpack.c.l.b16 %v585
    %v768 = vunpack.c.h.b16 %v585
    %v769 = vunpack.c.l.b16 %v586
    %v770 = vunpack.c.h.b16 %v586
    %v771 = vunpack.c.l.b16 %v587
    %v772 = vunpack.c.h.b16 %v587
    %v773 = vunpack.c.l.b16 %v588
    %v774 = vunpack.c.h.b16 %v588
    %v775 = vunpack.c.l.b16 %v589
    %v776 = vunpack.c.h.b16 %v589
    %v777 = vunpack.c.l.b16 %v590
    %v778 = vunpack.c.h.b16 %v590
    %v779 = vunpack.c.l.b16 %v591
    %v780 = vunpack.c.h.b16 %v591
    %v781 = vunpack.c.l.b16 %v592
    %v782 = vunpack.c.h.b16 %v592
    %v783 = vunpack.c.l.b16 %v593
    %v784 = vunpack.c.h.b16 %v593
    %v785 = vunpack.c.l.b16 %v594
    %v786 = vunpack.c.h.b16 %v594
    %v787 = vunpack.c.l.b16 %v595
    %v788 = vunpack.c.h.b16 %v595
    %v789 = vunpack.c.l.b16 %v596
    %v790 = vunpack.c.h.b16 %v596
    %v791 = vunpack.c.l.b16 %v597
    %v792 = vunpack.c.h.b16 %v597
    %v793 = vunpack.c.l.b16 %v598
    %v794 = vunpack.c.h.b16 %v598
    %v795 = vunpack.c.l.b16 %v599
    %v796 = vunpack.c.h.b16 %v599
    %v797 = vunpack.c.l.b16 %v600
    %v798 = vunpack.c.h.b16 %v600
    %v799 = vunpack.c.l.b16 %v601
    %v800 = vunpack.c.h.b16 %v601
    %v801 = vunpack.c.l.b16 %v602
    %v802 = vunpack.c.h.b16 %v602
    %v803 = vunpack.c.l.b16 %v603
    %v804 = vunpack.c.h.b16 %v603
    %v805 = vunpack.c.l.b16 %v604
    %v806 = vunpack.c.h.b16 %v604
    %v807 = vpack.c.b16 %v683, %v679
    %v808 = vpack.c.b16 %v684, %v680
    %v809 = vpack.c.b16 %v685, %v681
    %v810 = vpack.c.b16 %v686, %v682
    %v811 = vpack.c.b16 %v691, %v687
    %v812 = vpack.c.b16 %v692, %v688
    %v813 = vpack.c.b16 %v693, %v689
    %v814 = vpack.c.b16 %v694, %v690
    %v815 = vpack.c.b16 %v699, %v695
    %v816 = vpack.c.b16 %v700, %v696
    %v817 = vpack.c.b16 %v701, %v697
    %v818 = vpack.c.b16 %v702, %v698
    %v819 = vpack.c.b16 %v707, %v703
    %v820 = vpack.c.b16 %v708, %v704
    %v821 = vpack.c.b16 %v709, %v705
    %v822 = vpack.c.b16 %v710, %v706
    %v823 = vpack.c.b16 %v715, %v711
    %v824 = vpack.c.b16 %v716, %v712
    %v825 = vpack.c.b16 %v717, %v713
    %v826 = vpack.c.b16 %v718, %v714
    %v827 = vpack.c.b16 %v723, %v719
    %v828 = vpack.c.b16 %v724, %v720
    %v829 = vpack.c.b16 %v725, %v721
    %v830 = vpack.c.b16 %v726, %v722
    %v831 = vpack.c.b16 %v731, %v727
    %v832 = vpack.c.b16 %v732, %v728
    %v833 = vpack.c.b16 %v733, %v729
    %v834 = vpack.c.b16 %v734, %v730
    %v835 = vpack.c.b16 %v739, %v735
    %v836 = vpack.c.b16 %v740, %v736
    %v837 = vpack.c.b16 %v741, %v737
    %v838 = vpack.c.b16 %v742, %v738
    %v839 = vpack.c.b16 %v747, %v743
    %v840 = vpack.c.b16 %v748, %v744
    %v841 = vpack.c.b16 %v749, %v745
    %v842 = vpack.c.b16 %v750, %v746
    %v843 = vpack.c.b16 %v755, %v751
    %v844 = vpack.c.b16 %v756, %v752
    %v845 = vpack.c.b16 %v757, %v753
    %v846 = vpack.c.b16 %v758, %v754
    %v847 = vpack.c.b16 %v763, %v759
    %v848 = vpack.c.b16 %v764, %v760
    %v849 = vpack.c.b16 %v765, %v761
    %v850 = vpack.c.b16 %v766, %v762
    %v851 = vpack.c.b16 %v771, %v767
    %v852 = vpack.c.b16 %v772, %v768
    %v853 = vpack.c.b16 %v773, %v769
    %v854 = vpack.c.b16 %v774, %v770
    %v855 = vpack.c.b16 %v779, %v775
    %v856 = vpack.c.b16 %v780, %v776
    %v857 = vpack.c.b16 %v781, %v777
    %v858 = vpack.c.b16 %v782, %v778
    %v859 = vpack.c.b16 %v787, %v783
    %v860 = vpack.c.b16 %v788, %v784
    %v861 = vpack.c.b16 %v789, %v785
    %v862 = vpack.c.b16 %v790, %v786
    %v863 = vpack.c.b16 %v795, %v791
    %v864 = vpack.c.b16 %v796, %v792
    %v865 = vpack.c.b16 %v797, %v793
    %v866 = vpack.c.b16 %v798, %v794
    %v867 = vpack.c.b16 %v803, %v799
    %v868 = vpack.c.b16 %v804, %v800
    %v869 = vpack.c.b16 %v805, %v801
    %v870 = vpack.c.b16 %v806, %v802
    %935 = vmatpush.bf16.msra.mxu0 %v835
    %936 = vmatpush.bf16.msra.mxu0 %v831
    %937 = vmatpush.bf16.msra.mxu0 %v827
    %938 = vmatpush.bf16.msra.mxu0 %v823
    %939 = vmatpush.bf16.msra.mxu0 %v819
    %940 = vmatpush.bf16.msra.mxu0 %v815
    %941 = vmatpush.bf16.msra.mxu0 %v811
    %942 = vmatpush.bf16.msra.mxu0 %v807
    %943 = vmatmul.bf16.gmra.mxu0 %v539
    %v944 = vpop.f32.mrf.mxu0
    %v945 = vadd.f32 %v607, %v944
    %v946 = vpop.f32.mrf.mxu0
    %v947 = vadd.f32 %v607, %v946
    %948 = vdwg.mxu0
    %949 = vmatpush.bf16.msra.mxu0 %v867
    %950 = vmatpush.bf16.msra.mxu0 %v863
    %951 = vmatpush.bf16.msra.mxu0 %v859
    %952 = vmatpush.bf16.msra.mxu0 %v855
    %953 = vmatpush.bf16.msra.mxu0 %v851
    %954 = vmatpush.bf16.msra.mxu0 %v847
    %955 = vmatpush.bf16.msra.mxu0 %v843
    %956 = vmatpush.bf16.msra.mxu0 %v839
    %957 = vmatmul.bf16.gmra.mxu0 %v540
    %v958 = vpop.f32.mrf.mxu0
    %v959 = vadd.f32 %v945, %v958
    %v960 = vpop.f32.mrf.mxu0
    %v961 = vadd.f32 %v947, %v960
    %962 = vdwg.mxu0
    %963 = vmatpush.bf16.msra.mxu0 %v836
    %964 = vmatpush.bf16.msra.mxu0 %v832
    %965 = vmatpush.bf16.msra.mxu0 %v828
    %966 = vmatpush.bf16.msra.mxu0 %v824
    %967 = vmatpush.bf16.msra.mxu0 %v820
    %968 = vmatpush.bf16.msra.mxu0 %v816
    %969 = vmatpush.bf16.msra.mxu0 %v812
    %970 = vmatpush.bf16.msra.mxu0 %v808
    %971 = vmatmul.bf16.gmra.mxu0 %v539
    %v972 = vpop.f32.mrf.mxu0
    %v973 = vadd.f32 %v608, %v972
    %v974 = vpop.f32.mrf.mxu0
    %v975 = vadd.f32 %v608, %v974
    %976 = vdwg.mxu0
    %977 = vmatpush.bf16.msra.mxu0 %v868
    %978 = vmatpush.bf16.msra.mxu0 %v864
    %979 = vmatpush.bf16.msra.mxu0 %v860
    %980 = vmatpush.bf16.msra.mxu0 %v856
    %981 = vmatpush.bf16.msra.mxu0 %v852
    %982 = vmatpush.bf16.msra.mxu0 %v848
    %983 = vmatpush.bf16.msra.mxu0 %v844
    %984 = vmatpush.bf16.msra.mxu0 %v840
    %985 = vmatmul.bf16.gmra.mxu0 %v540
    %v986 = vpop.f32.mrf.mxu0
    %v987 = vadd.f32 %v973, %v986
    %v988 = vpop.f32.mrf.mxu0
    %v989 = vadd.f32 %v975, %v988
    %990 = vdwg.mxu0
    %991 = vmatpush.bf16.msra.mxu0 %v837
    %992 = vmatpush.bf16.msra.mxu0 %v833
    %993 = vmatpush.bf16.msra.mxu0 %v829
    %994 = vmatpush.bf16.msra.mxu0 %v825
    %995 = vmatpush.bf16.msra.mxu0 %v821
    %996 = vmatpush.bf16.msra.mxu0 %v817
    %997 = vmatpush.bf16.msra.mxu0 %v813
    %998 = vmatpush.bf16.msra.mxu0 %v809
    %999 = vmatmul.bf16.gmra.mxu0 %v539
    %v1000 = vpop.f32.mrf.mxu0
    %v1001 = vadd.f32 %v609, %v1000
    %v1002 = vpop.f32.mrf.mxu0
    %v1003 = vadd.f32 %v609, %v1002
    %1004 = vdwg.mxu0
    %1005 = vmatpush.bf16.msra.mxu0 %v869
    %1006 = vmatpush.bf16.msra.mxu0 %v865
    %1007 = vmatpush.bf16.msra.mxu0 %v861
    %1008 = vmatpush.bf16.msra.mxu0 %v857
    %1009 = vmatpush.bf16.msra.mxu0 %v853
    %1010 = vmatpush.bf16.msra.mxu0 %v849
    %1011 = vmatpush.bf16.msra.mxu0 %v845
    %1012 = vmatpush.bf16.msra.mxu0 %v841
    %1013 = vmatmul.bf16.gmra.mxu0 %v540
    %v1014 = vpop.f32.mrf.mxu0
    %v1015 = vadd.f32 %v1001, %v1014
    %v1016 = vpop.f32.mrf.mxu0
    %v1017 = vadd.f32 %v1003, %v1016
    %1018 = vdwg.mxu0
    %1019 = vmatpush.bf16.msra.mxu0 %v838
    %1020 = vmatpush.bf16.msra.mxu0 %v834
    %1021 = vmatpush.bf16.msra.mxu0 %v830
    %1022 = vmatpush.bf16.msra.mxu0 %v826
    %1023 = vmatpush.bf16.msra.mxu0 %v822
    %1024 = vmatpush.bf16.msra.mxu0 %v818
    %1025 = vmatpush.bf16.msra.mxu0 %v814
    %1026 = vmatpush.bf16.msra.mxu0 %v810
    %1027 = vmatmul.bf16.gmra.mxu0 %v539
    %v1028 = vpop.f32.mrf.mxu0
    %v1029 = vadd.f32 %v610, %v1028
    %v1030 = vpop.f32.mrf.mxu0
    %v1031 = vadd.f32 %v610, %v1030
    %1032 = vdwg.mxu0
    %1033 = vmatpush.bf16.msra.mxu0 %v870
    %1034 = vmatpush.bf16.msra.mxu0 %v866
    %1035 = vmatpush.bf16.msra.mxu0 %v862
    %1036 = vmatpush.bf16.msra.mxu0 %v858
    %1037 = vmatpush.bf16.msra.mxu0 %v854
    %1038 = vmatpush.bf16.msra.mxu0 %v850
    %1039 = vmatpush.bf16.msra.mxu0 %v846
    %1040 = vmatpush.bf16.msra.mxu0 %v842
    %1041 = vmatmul.bf16.gmra.mxu0 %v540
    %v1042 = vpop.f32.mrf.mxu0
    %v1043 = vadd.f32 %v1029, %v1042
    %v1044 = vpop.f32.mrf.mxu0
    %v1045 = vadd.f32 %v1031, %v1044
    %1046 = vdwg.mxu0
    %v1047 = vmax.f32 %v959, 0.0
    %v1048 = vmax.f32 %v987, 0.0
    %v1049 = vmax.f32 %v1015, 0.0
    %v1050 = vmax.f32 %v1043, 0.0
    %v1051 = vmax.f32 %v961, 0.0
    %v1052 = vmax.f32 %v989, 0.0
    %v1053 = vmax.f32 %v1017, 0.0
    %v1054 = vmax.f32 %v1045, 0.0
    %1055 = vst [vmem:[#allocation2] sm:$0xff] %v1047
    %1056 = vst [vmem:[#allocation2 + $0x8] sm:$0xff] %v1048
    %1057 = vst [vmem:[#allocation2 + $0x10] sm:$0xff] %v1049
    %1058 = vst [vmem:[#allocation2 + $0x18] sm:$0xff] %v1050
    %1059 = vst [vmem:[#allocation2 + $0x20] sm:$0xff] %v1051
    %1060 = vst [vmem:[#allocation2 + $0x28] sm:$0xff] %v1052
    %1061 = vst [vmem:[#allocation2 + $0x30] sm:$0xff] %v1053
    %1062 = vst [vmem:[#allocation2 + $0x38] sm:$0xff] %v1054
    // Predicated region
    $region22: #{positionwise_feedforward.1} parent=1 // pred_check
      _
    $region23: #{positionwise_feedforward.1} parent=1 // pred_check_branch
      %1064 = sbr.rel (0) target = $region25
    $region24: #{positionwise_feedforward.1} parent=1 // pred_region
      %1066 = vsyncadd [#allocation3], 0
      %s1067 = sshll.u32 [#allocation2], 4
      %s1068 = int_to_ptr.vmem [resolvable:$true] %s1067
      %s1069 = sshll.u32 %s5, 4
      %s1070 = int_to_ptr.hbm [resolvable:$true] %s1069
      %1075 = dma.vmem_to_hbm [thread:$0]  %s1068, 1024, %s1070, [#allocation3], 512, 512, 32
    $region25: #{positionwise_feedforward.1} parent=1 // pred_fallthru
      _
    // Predicated region
    $region26: #{positionwise_feedforward.1} parent=1 // pred_check
      _
    $region27: #{positionwise_feedforward.1} parent=1 // pred_check_branch
      %1077 = sbr.rel (0) target = $region29
    $region28: #{positionwise_feedforward.1} parent=1 // pred_region
      %1079 = dma.done [#allocation3], 1024
    $region29: #{positionwise_feedforward.1} parent=1 // pred_fallthru
      _
    %1080 = vsyncpa [#allocation3], 1

</llo_original>
